<compile_context>
chip_gen: v7x
topology: tpu7x:2x2x1
jax: 0.10.0
libtpu: 0.0.40
codegen_flags: <defaults>
</compile_context>

<pallas_src>
import math
import jax
import jax.numpy as jnp
from jax import lax
from jax.experimental import pallas as pl
from jax.experimental.pallas import tpu as pltpu


def _round_up(x, m):
    return ((x + m - 1) // m) * m


def mlp_kernel(x_ref, w1_ref, w2_ref, o_ref):
    """Fused (x @ W1) -> GELU -> (@ W2), f32-accumulated directly into o_ref.

    x_ref : (TM, dim_p)   compute dtype (bf16 by default)
    w1_ref: (dim_p, TH)   compute dtype (pre-transposed W1)
    w2_ref: (TH, dim_p)   compute dtype (pre-transposed W2)
    o_ref : (TM, dim_p)   f32; block index constant over the hidden grid axis,
                          so the output block doubles as the accumulator.
    """
    j = pl.program_id(1)

    @pl.when(j == 0)
    def _():
        o_ref[...] = jnp.zeros_like(o_ref)

    # First linear (MXU), f32 accumulation.
    h = jnp.dot(x_ref[...], w1_ref[...], preferred_element_type=jnp.float32)

    # Exact GELU (torch.nn.GELU default): 0.5 * h * (1 + erf(h / sqrt(2))), in f32.
    h = 0.5 * h * (1.0 + lax.erf(h * (1.0 / math.sqrt(2.0))))

    # Dropout(p=0.0) is the identity — omitted.

    # Second linear: partial sum over this hidden tile, accumulated into o_ref.
    o_ref[...] += jnp.dot(h.astype(w2_ref.dtype), w2_ref[...],
                          preferred_element_type=jnp.float32)


def prepare_weights(w1, w2, *, compute_dtype=jnp.bfloat16):
    """One-time weight relayout (do this per parameter update, NOT per forward).

    torch Linear stores (out_features, in_features); we transpose once, zero-pad
    last dims to lane-dense multiples of 128, and cast to the MXU compute dtype.
    Use compute_dtype=jnp.float32 if strict (<=1e-4) parity with torch is needed.
    """
    hidden, dim = w1.shape
    assert w2.shape == (dim, hidden)
    dim_p = _round_up(dim, 128)
    hidden_p = _round_up(hidden, 128)
    w1_t = jnp.pad(w1.T, ((0, dim_p - dim), (0, hidden_p - hidden))).astype(compute_dtype)
    w2_t = jnp.pad(w2.T, ((0, hidden_p - hidden), (0, dim_p - dim))).astype(compute_dtype)
    return w1_t, w2_t


def mlp_forward(x, w1_t, w2_t, *, tm=512):
    """x: (batch, seq, dim); w1_t: (dim_p, hidden_p), w2_t: (hidden_p, dim_p)
    as produced by prepare_weights()."""
    batch, seq, dim = x.shape
    dim_p, hidden_p = w1_t.shape
    assert w2_t.shape == (hidden_p, dim_p)
    n = batch * seq
    compute_dtype = w1_t.dtype
    wb = jnp.dtype(compute_dtype).itemsize

    # ---- VMEM budget (v7x: 64 MiB/TC; v5e/v6e: 128 MiB) ----------------------
    try:
        info = pltpu.get_tpu_info()
        vmem_cap = int(getattr(info, "vmem_capacity_bytes", 64 * 1024 * 1024))
    except Exception:
        vmem_cap = 64 * 1024 * 1024          # conservative (v7x-sized) fallback
    budget = min(int(0.75 * vmem_cap), 100 * 1024 * 1024)

    # ---- tile selection ------------------------------------------------------
    tm = min(tm, _round_up(n, 8))
    # Megacore balance (v7x): keep >= 2 row tiles so both TensorCores get work.
    if n > 8 and _round_up(n, tm) // tm < 2:
        tm = _round_up(pl.cdiv(n, 2), 8)

    def footprint(tm_, th_):
        x_b = 2 * tm_ * dim_p * wb            # double-buffered x tiles
        o_b = 2 * tm_ * dim_p * 4             # double-buffered f32 out tiles (acc)
        w_b = 2 * 2 * dim_p * th_ * wb        # W1 + W2 tiles, 2 buffers each
        h_b = tm_ * th_ * (4 + wb)            # f32 hidden intermediate + cast copy
        return x_b + o_b + w_b + h_b

    # Prefer full weight residency (single hidden step); shrink th first, tm last.
    th = hidden_p
    while footprint(tm, th) > budget and th > 128:
        th -= 128
        while hidden_p % th:
            th -= 128
    while footprint(tm, th) > budget and tm > 64:
        tm = max(64, _round_up(tm // 2, 8))

    n_p = _round_up(n, tm)
    grid = (n_p // tm, hidden_p // th)
    num_row_tiles = grid[0]

    # Flatten + zero-pad + cast activations (weights already prepared/cast).
    x2d = jnp.pad(x.reshape(n, dim),
                  ((0, n_p - n), (0, dim_p - dim))).astype(compute_dtype)

    cost = pl.CostEstimate(
        flops=4 * n_p * dim_p * hidden_p,                        # two matmuls
        transcendentals=n_p * hidden_p,                          # erf
        bytes_accessed=int(n_p * dim_p * wb                      # x read
                           + n_p * dim_p * 4                     # out write (f32)
                           + num_row_tiles * 2 * dim_p * hidden_p * wb),  # W re-stream
    )

    out2d = pl.pallas_call(
        mlp_kernel,
        out_shape=jax.ShapeDtypeStruct((n_p, dim_p), jnp.float32),
        grid_spec=pltpu.PrefetchScalarGridSpec(
            num_scalar_prefetch=0,
            grid=grid,
            in_specs=[
                # x tile: streams over rows, constant over the hidden axis.
                pl.BlockSpec((tm, dim_p), lambda i, j: (i, 0)),
                # Weight tiles: constant over the row axis (and over the whole
                # grid when th == hidden_p) -> VMEM-resident.
                pl.BlockSpec((dim_p, th), lambda i, j: (0, j)),
                pl.BlockSpec((th, dim_p), lambda i, j: (j, 0)),
            ],
            out_specs=pl.BlockSpec((tm, dim_p), lambda i, j: (i, 0)),
        ),
        compiler_params=pltpu.CompilerParams(
            dimension_semantics=("parallel", "arbitrary"),
            vmem_limit_bytes=int(min(int(0.9 * vmem_cap),
                                     budget + 16 * 1024 * 1024)),
        ),
        cost_estimate=cost,
    )(x2d, w1_t, w2_t)

    return out2d[:n, :dim].astype(x.dtype).reshape(batch, seq, dim)


def init_params(key, dim, hidden_dim):
    """kaiming_normal_ (fan_in, gain=sqrt(2)) on both Linear weights, bias=False."""
    k1, k2 = jax.random.split(key)
    std1 = math.sqrt(2.0 / dim)         # W1: (hidden_dim, dim), fan_in = dim
    std2 = math.sqrt(2.0 / hidden_dim)  # W2: (dim, hidden_dim), fan_in = hidden_dim
    w1 = std1 * jax.random.normal(k1, (hidden_dim, dim), dtype=jnp.float32)
    w2 = std2 * jax.random.normal(k2, (dim, hidden_dim), dtype=jnp.float32)
    return w1, w2


if __name__ == "__main__":
    batch, seq, dim, hidden_dim = 2, 8, 32, 64

    key = jax.random.PRNGKey(0)
    kx, kp = jax.random.split(key)
    x = jax.random.normal(kx, (batch, seq, dim), dtype=jnp.float32)
    w1, w2 = init_params(kp, dim, hidden_dim)

    # One-time weight relayout + cast (bf16 MXU operands, f32 in-kernel accumulation).
    w1_t, w2_t = prepare_weights(w1, w2, compute_dtype=jnp.bfloat16)

    out = mlp_forward(x, w1_t, w2_t)
    out = jax.block_until_ready(out)

    # Reference in plain f32 JAX (same math as torch: x @ W1^T -> exact GELU -> @ W2^T).
    h_ref = x.reshape(-1, dim) @ w1.T
    h_ref = 0.5 * h_ref * (1.0 + lax.erf(h_ref / math.sqrt(2.0)))
    ref = (h_ref @ w2.T).reshape(batch, seq, dim)

    assert out.shape == (batch, seq, dim)
    # bf16 MXU operands with f32 accumulation -> relaxed parity vs. the f32 reference.
    # TODO(synk): pass compute_dtype=jnp.float32 to prepare_weights for 1e-4 parity.
    assert jnp.allclose(out, ref, atol=5e-2, rtol=5e-2), float(jnp.max(jnp.abs(out - ref)))

    print("KERNEL_OK")
</pallas_src>

<mosaic_0001>
module attributes {stable_mosaic.version = 11 : i64} {
  func.func @mlp_kernel(%arg0: i32, %arg1: i32, %arg2: memref<8x128xbf16, #tpu.memory_space<vmem>>, %arg3: memref<128x128xbf16, #tpu.memory_space<vmem>>, %arg4: memref<128x128xbf16, #tpu.memory_space<vmem>>, %arg5: memref<8x128xf32, #tpu.memory_space<vmem>>) attributes {dimension_semantics = [#tpu.dimension_semantics<parallel>, #tpu.dimension_semantics<arbitrary>], iteration_bounds = array<i64: 2, 1>, scalar_prefetch = 0 : i64, scratch_operands = 0 : i64, tpu.core_type = #tpu.core_type<tc>, window_params = [{transform_indices = @transform_0, window_bounds = array<i64: 8, 128>}, {transform_indices = @transform_1, window_bounds = array<i64: 128, 128>}, {transform_indices = @transform_2, window_bounds = array<i64: 128, 128>}, {transform_indices = @transform_3, window_bounds = array<i64: 8, 128>}]} {
    %c0_i32 = arith.constant 0 : i32
    %0 = arith.cmpi eq, %arg1, %c0_i32 : i32
    %1 = arith.extui %0 : i1 to i32
    %c0_i32_0 = arith.constant 0 : i32
    %2 = arith.cmpi ne, %1, %c0_i32_0 : i32
    scf.if %2 {
      %cst_14 = arith.constant 0.000000e+00 : f32
      %20 = vector.broadcast %cst_14 : f32 to vector<8x128xf32>
      %c0_15 = arith.constant 0 : index
      %c0_16 = arith.constant 0 : index
      %21 = vector.load %arg5[%c0_15, %c0_16] : memref<8x128xf32, #tpu.memory_space<vmem>>, vector<8x128xf32>
      tpu.vector_store %arg5[%c0_15, %c0_16], %20 {strides = array<i32>} : memref<8x128xf32, #tpu.memory_space<vmem>>, vector<8x128xf32>,
    } else {
    }
    %c0 = arith.constant 0 : index
    %c0_1 = arith.constant 0 : index
    %3 = vector.load %arg2[%c0, %c0_1] : memref<8x128xbf16, #tpu.memory_space<vmem>>, vector<8x128xbf16>
    %c0_2 = arith.constant 0 : index
    %c0_3 = arith.constant 0 : index
    %4 = vector.load %arg3[%c0_2, %c0_3] : memref<128x128xbf16, #tpu.memory_space<vmem>>, vector<128x128xbf16>
    %cst = arith.constant dense<0.000000e+00> : vector<8x128xf32>
    %5 = tpu.matmul %3, %4, %cst {dimension_numbers = #tpu.dot_dimension_numbers<[1], [0], [0], [1], [0, 0, 1, 1], [], []>} : vector<8x128xbf16>, vector<128x128xbf16>, vector<8x128xf32> -> vector<8x128xf32>
    %cst_4 = arith.constant 5.000000e-01 : f32
    %6 = vector.broadcast %cst_4 : f32 to vector<8x128xf32>
    %7 = arith.mulf %6, %5 : vector<8x128xf32>
    %cst_5 = arith.constant 0.707106769 : f32
    %8 = vector.broadcast %cst_5 : f32 to vector<8x128xf32>
    %9 = arith.mulf %5, %8 : vector<8x128xf32>
    %10 = math.erf %9 : vector<8x128xf32>
    %cst_6 = arith.constant 1.000000e+00 : f32
    %11 = vector.broadcast %cst_6 : f32 to vector<8x128xf32>
    %12 = arith.addf %11, %10 : vector<8x128xf32>
    %13 = arith.mulf %7, %12 : vector<8x128xf32>
    %c0_7 = arith.constant 0 : index
    %c0_8 = arith.constant 0 : index
    %14 = vector.load %arg5[%c0_7, %c0_8] : memref<8x128xf32, #tpu.memory_space<vmem>>, vector<8x128xf32>
    %15 = arith.truncf %13 : vector<8x128xf32> to vector<8x128xbf16>
    %c0_9 = arith.constant 0 : index
    %c0_10 = arith.constant 0 : index
    %16 = vector.load %arg4[%c0_9, %c0_10] : memref<128x128xbf16, #tpu.memory_space<vmem>>, vector<128x128xbf16>
    %cst_11 = arith.constant dense<0.000000e+00> : vector<8x128xf32>
    %17 = tpu.matmul %15, %16, %cst_11 {dimension_numbers = #tpu.dot_dimension_numbers<[1], [0], [0], [1], [0, 0, 1, 1], [], []>} : vector<8x128xbf16>, vector<128x128xbf16>, vector<8x128xf32> -> vector<8x128xf32>
    %18 = arith.addf %14, %17 : vector<8x128xf32>
    %c0_12 = arith.constant 0 : index
    %c0_13 = arith.constant 0 : index
    %19 = vector.load %arg5[%c0_12, %c0_13] : memref<8x128xf32, #tpu.memory_space<vmem>>, vector<8x128xf32>
    tpu.vector_store %arg5[%c0_12, %c0_13], %18 {strides = array<i32>} : memref<8x128xf32, #tpu.memory_space<vmem>>, vector<8x128xf32>,
    return
  }
  func.func @transform_0(%arg0: i32, %arg1: i32) -> (i32, i32) {
    %c0_i32 = arith.constant 0 : i32
    %c0_i32_0 = arith.constant 0 : i32
    return %arg0, %c0_i32 : i32, i32
  }
  func.func @transform_1(%arg0: i32, %arg1: i32) -> (i32, i32) {
    %c0_i32 = arith.constant 0 : i32
    %c0_i32_0 = arith.constant 0 : i32
    return %c0_i32, %arg1 : i32, i32
  }
  func.func @transform_2(%arg0: i32, %arg1: i32) -> (i32, i32) {
    %c0_i32 = arith.constant 0 : i32
    %c0_i32_0 = arith.constant 0 : i32
    return %arg1, %c0_i32 : i32, i32
  }
  func.func @transform_3(%arg0: i32, %arg1: i32) -> (i32, i32) {
    %c0_i32 = arith.constant 0 : i32
    %c0_i32_0 = arith.constant 0 : i32
    return %arg0, %c0_i32 : i32, i32
  }
}

</mosaic_0001>

<llo_original>
// kernel: tpu_custom_call.1
$region0: #{tpu_custom_call.1}
  #allocation0 [shape = 'u32[]', space=smem, size = 0x4, offset = 0x4, fixed_abs, tag = 'smem constant byte address 0x4 - core index']
  #allocation1 [shape = 'u32[144,128]{1,0:T(1,128)}', space=vmem, size = 0x12000, scoped, tag = 'internal scratch']
  %s0 = inlined_call_operand.hbm [shape: bf16[16,128], index: 0, kind: input, shape index: {}]
  %s1 = inlined_call_operand.hbm [shape: bf16[128,128], index: 1, kind: input, shape index: {}]
  %s2 = inlined_call_operand.hbm [shape: bf16[128,128], index: 2, kind: input, shape index: {}]
  %s3 = inlined_call_operand.hbm [shape: f32[16,128], index: 3, kind: output, shape index: {}]
  %s4 = sld [smem:[#allocation0]]
  $region61: #{tpu_custom_call.1} parent=0
    _
  %s6 = ssub.s32 1, %s4
  %s7 = scalar_select 0, %s6, %s4
  $region1: #{tpu_custom_call.1} parent=0
    #allocation2 [shape = 'u8[4096]{0}', space=vmem, size = 0x1000, scoped, tag = 'input window, operand 0']
    #allocation3 [shape = 's32[2]{0}', space=sflag, size = 0x8, scoped, tag = 'scoped memory for tpu_custom_call.1']
    #allocation4 [shape = 's32[2]{0}', space=sflag, size = 0x8, scoped, tag = 'scoped memory for tpu_custom_call.1']
    #allocation5 [shape = 'u8[32768]{0}', space=vmem, size = 0x8000, scoped, tag = 'input window, operand 1, single buffered']
    #allocation6 [shape = 's32[1]{0}', space=sflag, size = 0x4, scoped, tag = 'scoped memory for tpu_custom_call.1']
    #allocation7 [shape = 'u8[32768]{0}', space=vmem, size = 0x8000, scoped, tag = 'input window, operand 2, single buffered']
    #allocation8 [shape = 'u8[8192]{0}', space=vmem, size = 0x2000, scoped, tag = 'output window, operand 0']
    %8 = vsyncpa [#allocation3], 0
    %s9 = scalar_lea.sflag [#allocation3], 1
    %10 = vsyncpa %s9, 0
    %11 = vsyncpa [#allocation6], 0
    %12 = vsyncpa [#allocation4], 0
    %s13 = scalar_lea.sflag [#allocation4], 1
    %14 = vsyncpa %s13, 0
    loop: start=0, step=1, limit=4
    $region2: #{tpu_custom_call.1} parent=1 // loop_pre_header
      _
    $region3: #{tpu_custom_call.1} parent=1 // loop_header
      %s16 = sphi 0, %s20
      %p17 = scmp.ge.s32.totalorder %s16, 4
      %s23 = sphi 0, %s35
      %s24 = sphi 0, %s31
      %s25 = sphi 0, %s23
      %s26 = sphi 0, %s24
      %s27 = sphi 0, %s25
      %s28 = sphi 0, %s26
      %s38 = sphi 0, %s40
      %s41 = sphi 0, %s38
      %s42 = sphi 0, %s41
      %s58 = sphi 0, %s42
      %s64 = sphi 0, %s66
      %s67 = sphi 0, %s64
      %s68 = sphi 0, %s67
      %s84 = sphi 0, %s68
      %s90 = sphi 0, %s92
      %s93 = sphi 0, %s90
      %s94 = sphi 0, %s93
      %s110 = sphi 0, %s94
      %s116 = sphi 0, %s118
      %s119 = sphi 0, %s116
      %s120 = sphi 0, %s119
      %s136 = sphi 0, %s120
    $region4: #{tpu_custom_call.1} parent=1 // loop_header_branch
      %19 = sbr.rel (%p17) target = $region8
    $region5: #{tpu_custom_call.1} parent=1 // loop_body
      %s21 = ssub.s32 %s16, 1
      %s22 = ssub.s32 %s16, 2
      %s29 = sadd.s32 1, %s24
      %p30 = scmp.ge.s32.totalorder %s29, 1
      %s31 = scalar_select %p30, 0, %s29
      %s32 = sadd.s32 1, %s23
      %s33 = scalar_select %p30, %s32, %s23
      %p34 = scmp.ge.s32.totalorder %s33, 2
      %s35 = scalar_select %p34, 0, %s33
      %s36 = ssub.s32 %s23, %s35
      %p37 = scmp.eq.s32.totalorder %s36, 0
      %s39 = sadd.s32 %s38, 1
      %s40 = scalar_select %p37, %s38, %s39
      %p43 = pneg %p37
      %p44 = scmp.eq.s32.totalorder %s16, 1
      %p45 = por %p43, %p44
      %p46 = scmp.ne.s32.totalorder %s38, %s41
      %p47 = scmp.eq.s32.totalorder %s16, 0
      %p48 = por %p46, %p47
      %p49 = scmp.ne.s32.totalorder %s38, %s41
      %p50 = scmp.eq.s32.totalorder %s21, 1
      %p51 = por %p49, %p50
      %p52 = scmp.ne.s32.totalorder %s41, %s42
      %p53 = scmp.eq.s32.totalorder %s21, 0
      %p54 = por %p52, %p53
      %p55 = scmp.ne.s32.totalorder %s41, %s42
      %p56 = scmp.eq.s32.totalorder %s22, 1
      %p57 = por %p55, %p56
      %p59 = scmp.ne.s32.totalorder %s42, %s58
      %p60 = scmp.eq.s32.totalorder %s22, 0
      %p61 = por %p59, %p60
      %s62 = ssub.s32 %s24, %s31
      %p63 = scmp.eq.s32.totalorder %s62, 0
      %s65 = sadd.s32 %s64, 1
      %s66 = scalar_select %p63, %s64, %s65
      %p69 = pneg %p63
      %p70 = scmp.eq.s32.totalorder %s16, 1
      %p71 = por %p69, %p70
      %p72 = scmp.ne.s32.totalorder %s64, %s67
      %p73 = scmp.eq.s32.totalorder %s16, 0
      %p74 = por %p72, %p73
      %p75 = scmp.ne.s32.totalorder %s64, %s67
      %p76 = scmp.eq.s32.totalorder %s21, 1
      %p77 = por %p75, %p76
      %p78 = scmp.ne.s32.totalorder %s67, %s68
      %p79 = scmp.eq.s32.totalorder %s21, 0
      %p80 = por %p78, %p79
      %p81 = scmp.ne.s32.totalorder %s67, %s68
      %p82 = scmp.eq.s32.totalorder %s22, 1
      %p83 = por %p81, %p82
      %p85 = scmp.ne.s32.totalorder %s68, %s84
      %p86 = scmp.eq.s32.totalorder %s22, 0
      %p87 = por %p85, %p86
      %s88 = ssub.s32 %s24, %s31
      %p89 = scmp.eq.s32.totalorder %s88, 0
      %s91 = sadd.s32 %s90, 1
      %s92 = scalar_select %p89, %s90, %s91
      %p95 = pneg %p89
      %p96 = scmp.eq.s32.totalorder %s16, 1
      %p97 = por %p95, %p96
      %p98 = scmp.ne.s32.totalorder %s90, %s93
      %p99 = scmp.eq.s32.totalorder %s16, 0
      %p100 = por %p98, %p99
      %p101 = scmp.ne.s32.totalorder %s90, %s93
      %p102 = scmp.eq.s32.totalorder %s21, 1
      %p103 = por %p101, %p102
      %p104 = scmp.ne.s32.totalorder %s93, %s94
      %p105 = scmp.eq.s32.totalorder %s21, 0
      %p106 = por %p104, %p105
      %p107 = scmp.ne.s32.totalorder %s93, %s94
      %p108 = scmp.eq.s32.totalorder %s22, 1
      %p109 = por %p107, %p108
      %p111 = scmp.ne.s32.totalorder %s94, %s110
      %p112 = scmp.eq.s32.totalorder %s22, 0
      %p113 = por %p111, %p112
      %s114 = ssub.s32 %s23, %s35
      %p115 = scmp.eq.s32.totalorder %s114, 0
      %s117 = sadd.s32 %s116, 1
      %s118 = scalar_select %p115, %s116, %s117
      %p121 = pneg %p115
      %p122 = scmp.eq.s32.totalorder %s16, 1
      %p123 = por %p121, %p122
      %p124 = scmp.ne.s32.totalorder %s116, %s119
      %p125 = scmp.eq.s32.totalorder %s16, 0
      %p126 = por %p124, %p125
      %p127 = scmp.ne.s32.totalorder %s116, %s119
      %p128 = scmp.eq.s32.totalorder %s21, 1
      %p129 = por %p127, %p128
      %p130 = scmp.ne.s32.totalorder %s119, %s120
      %p131 = scmp.eq.s32.totalorder %s21, 0
      %p132 = por %p130, %p131
      %p133 = scmp.ne.s32.totalorder %s119, %s120
      %p134 = scmp.eq.s32.totalorder %s22, 1
      %p135 = por %p133, %p134
      %p137 = scmp.ne.s32.totalorder %s120, %s136
      %p138 = scmp.eq.s32.totalorder %s22, 0
      %p139 = por %p137, %p138
      %p140 = scmp.le.s32.totalorder 1, %s16
      %p141 = scmp.lt.s32.totalorder %s16, 3
      %p142 = pnand %p140, %p141
      %p143 = pneg %p142
      // Predicated region
      $region9: #{tpu_custom_call.1} parent=5 // pred_check
        _
      $region10: #{tpu_custom_call.1} parent=5 // pred_check_branch
        %145 = sbr.rel (%p142) target = $region12
      $region11: #{tpu_custom_call.1} parent=5 // pred_region
        %s146 = ssub.s32 %s16, 1
        // Predicated region
        $region13: #{tpu_custom_call.1} parent=11 // pred_check
          %p147 = pneg %p80
        $region14: #{tpu_custom_call.1} parent=11 // pred_check_branch
          %149 = sbr.rel (%p147) target = $region16
        $region15: #{tpu_custom_call.1} parent=11 // pred_region
          %s151 = ssub.s32 1024, 1024
          %152 = vsyncadd [#allocation6], %s151
          %s153 = smul.addr %s26, 64
          %s154 = scalar_lea.hbm %s1, %s153
          %s155 = sshll.u32 [#allocation5], 4
          %s156 = int_to_ptr.vmem [resolvable:$true] %s155
          %161 = dma.hbm_to_vmem [thread:$0]  %s154, 1024, %s156, [#allocation6], 64, 64, 4
        $region16: #{tpu_custom_call.1} parent=11 // pred_fallthru
          _
        // Predicated region
        $region17: #{tpu_custom_call.1} parent=11 // pred_check
          %p162 = pneg %p106
        $region18: #{tpu_custom_call.1} parent=11 // pred_check_branch
          %164 = sbr.rel (%p162) target = $region20
        $region19: #{tpu_custom_call.1} parent=11 // pred_region
          %s165 = smul.u32 16, %s26
          %s167 = ssub.s32 1024, 1024
          %168 = vsyncadd [#allocation6], %s167
          %s169 = smul.addr %s165, 64
          %s170 = scalar_lea.hbm %s2, %s169
          %s171 = sshll.u32 [#allocation7], 4
          %s172 = int_to_ptr.vmem [resolvable:$true] %s171
          %177 = dma.hbm_to_vmem [thread:$0]  %s170, 1024, %s172, [#allocation6], 64, 64, 4
        $region20: #{tpu_custom_call.1} parent=11 // pred_fallthru
          _
      $region12: #{tpu_custom_call.1} parent=5 // pred_fallthru
        _
      %p178 = scmp.lt.s32.totalorder %s16, 2
      // Predicated region
      $region21: #{tpu_custom_call.1} parent=5 // pred_check
        %p179 = pneg %p178
      $region22: #{tpu_custom_call.1} parent=5 // pred_check_branch
        %181 = sbr.rel (%p179) target = $region24
      $region23: #{tpu_custom_call.1} parent=5 // pred_region
        // Predicated region
        $region25: #{tpu_custom_call.1} parent=23 // pred_check
          %p182 = pneg %p48
        $region26: #{tpu_custom_call.1} parent=23 // pred_check_branch
          %184 = sbr.rel (%p182) target = $region28
        $region27: #{tpu_custom_call.1} parent=23 // pred_region
          %s185 = sand.u32 %s38, 1
          %s186 = scalar_lea.sflag [#allocation3], %s185
          %s187 = sand.u32 %s38, 1
          %s188 = smul.addr %s187, 4
          %s189 = scalar_lea.vmem [#allocation2], %s188
          %s191 = ssub.s32 64, 64
          %192 = vsyncadd %s186, %s191
          %s193 = smul.addr %s23, 64
          %s194 = scalar_lea.hbm %s0, %s193
          %s196 = sshll.u32 %s189, 4
          %s197 = int_to_ptr.vmem [resolvable:$true] %s196
          %199 = dma.hbm_to_vmem [thread:$0]  %s194, 64, %s197, %s186
        $region28: #{tpu_custom_call.1} parent=23 // pred_fallthru
          _
      $region24: #{tpu_custom_call.1} parent=5 // pred_fallthru
        _
      %p200 = scmp.le.s32.totalorder 1, %s16
      %p201 = scmp.lt.s32.totalorder %s16, 3
      %p202 = pnand %p200, %p201
      %p203 = pneg %p202
      // Predicated region
      $region29: #{tpu_custom_call.1} parent=5 // pred_check
        _
      $region30: #{tpu_custom_call.1} parent=5 // pred_check_branch
        %205 = sbr.rel (%p202) target = $region32
      $region31: #{tpu_custom_call.1} parent=5 // pred_region
        %s206 = ssub.s32 %s16, 1
        %s207 = sand.u32 %s41, 1
        %s208 = scalar_lea.sflag [#allocation3], %s207
        %s209 = sand.u32 %s41, 1
        %s210 = smul.addr %s209, 4
        %s211 = scalar_lea.vmem [#allocation2], %s210
        // Predicated region
        $region33: #{tpu_custom_call.1} parent=31 // pred_check
          %p212 = pneg %p54
        $region34: #{tpu_custom_call.1} parent=31 // pred_check_branch
          %214 = sbr.rel (%p212) target = $region36
        $region35: #{tpu_custom_call.1} parent=31 // pred_region
          %215 = dma.done %s208, 64
        $region36: #{tpu_custom_call.1} parent=31 // pred_fallthru
          _
        // Predicated region
        $region37: #{tpu_custom_call.1} parent=31 // pred_check
          %p216 = pneg %p80
        $region38: #{tpu_custom_call.1} parent=31 // pred_check_branch
          %218 = sbr.rel (%p216) target = $region40
        $region39: #{tpu_custom_call.1} parent=31 // pred_region
          %219 = dma.done [#allocation6], 1024
        $region40: #{tpu_custom_call.1} parent=31 // pred_fallthru
          _
        // Predicated region
        $region41: #{tpu_custom_call.1} parent=31 // pred_check
          %p220 = pneg %p106
        $region42: #{tpu_custom_call.1} parent=31 // pred_check_branch
          %222 = sbr.rel (%p220) target = $region44
        $region43: #{tpu_custom_call.1} parent=31 // pred_region
          %223 = dma.done [#allocation6], 1024
        $region44: #{tpu_custom_call.1} parent=31 // pred_fallthru
          _
        %s224 = sand.u32 %s41, 1
        %s225 = scalar_lea.sflag [#allocation3], %s224
        %s226 = sand.u32 %s41, 1
        %s227 = smul.addr %s226, 4
        %s228 = scalar_lea.vmem [#allocation2], %s227
        %p229 = pneg %p54
        %p230 = pneg %p51
        %p231 = pneg %p80
        %p232 = pneg %p77
        %p233 = pneg %p106
        %p234 = pneg %p103
        %p235 = pneg %p132
        %p236 = pneg %p129
        %s237 = sand.u32 %s119, 1
        %s238 = scalar_lea.sflag [#allocation4], %s237
        %s239 = sand.u32 %s119, 1
        %s240 = smul.addr %s239, 8
        %s241 = scalar_lea.vmem [#allocation8], %s240
        %s242 = smul.u32 16, %s26
        %p244 = scmp.eq.s32.totalorder %s26, 0
        // Predicated region
        $region45: #{tpu_custom_call.1} parent=31 // pred_check
          %p245 = pneg %p244
        $region46: #{tpu_custom_call.1} parent=31 // pred_check_branch
          %247 = sbr.rel (%p245) target = $region48
        $region47: #{tpu_custom_call.1} parent=31 // pred_region
          %248 = vst [vmem:[%s241] sm:$0xff] 0.0
        $region48: #{tpu_custom_call.1} parent=31 // pred_fallthru
          _
        %v249 = vld [vmem:[%s211] sm:$0xf]
        %v250 = vld [vmem:[#allocation5] sm:$0xf]
        %v251 = vld [vmem:[#allocation5 + $0x4] sm:$0xf]
        %v252 = vld [vmem:[#allocation5 + $0x8] sm:$0xf]
        %v253 = vld [vmem:[#allocation5 + $0xc] sm:$0xf]
        %v254 = vld [vmem:[#allocation5 + $0x10] sm:$0xf]
        %v255 = vld [vmem:[#allocation5 + $0x14] sm:$0xf]
        %v256 = vld [vmem:[#allocation5 + $0x18] sm:$0xf]
        %v257 = vld [vmem:[#allocation5 + $0x1c] sm:$0xf]
        %v258 = vld [vmem:[#allocation5 + $0x20] sm:$0xf]
        %v259 = vld [vmem:[#allocation5 + $0x24] sm:$0xf]
        %v260 = vld [vmem:[#allocation5 + $0x28] sm:$0xf]
        %v261 = vld [vmem:[#allocation5 + $0x2c] sm:$0xf]
        %v262 = vld [vmem:[#allocation5 + $0x30] sm:$0xf]
        %v263 = vld [vmem:[#allocation5 + $0x34] sm:$0xf]
        %v264 = vld [vmem:[#allocation5 + $0x38] sm:$0xf]
        %v265 = vld [vmem:[#allocation5 + $0x3c] sm:$0xf]
        %v282 = vunpack.c.l.b16 %v250
        %v283 = vunpack.c.l.b16 %v251
        %v284 = vunpack.c.l.b16 %v252
        %v285 = vunpack.c.l.b16 %v253
        %v286 = vunpack.c.l.b16 %v254
        %v287 = vunpack.c.l.b16 %v255
        %v288 = vunpack.c.l.b16 %v256
        %v289 = vunpack.c.l.b16 %v257
        %v290 = vunpack.c.l.b16 %v258
        %v291 = vunpack.c.l.b16 %v259
        %v292 = vunpack.c.l.b16 %v260
        %v293 = vunpack.c.l.b16 %v261
        %v294 = vunpack.c.l.b16 %v262
        %v295 = vunpack.c.l.b16 %v263
        %v296 = vunpack.c.l.b16 %v264
        %v297 = vunpack.c.l.b16 %v265
        %v298 = vpack.c.b16 %v283, %v282
        %v299 = vpack.c.b16 %v285, %v284
        %v300 = vpack.c.b16 %v287, %v286
        %v301 = vpack.c.b16 %v289, %v288
        %v302 = vpack.c.b16 %v291, %v290
        %v303 = vpack.c.b16 %v293, %v292
        %v304 = vpack.c.b16 %v295, %v294
        %v305 = vpack.c.b16 %v297, %v296
        %314 = vmatprep.subr.bf16.mxu0 0
        %315 = vmatpush1.bf16.msra.mxu0 %v298
        %316 = vmatprep.subr.bf16.mxu0 0
        %317 = vmatpush1.bf16.msra.mxu0 %v299
        %318 = vmatprep.subr.bf16.mxu0 0
        %319 = vmatpush1.bf16.msra.mxu0 %v300
        %320 = vmatprep.subr.bf16.mxu0 0
        %321 = vmatpush1.bf16.msra.mxu0 %v301
        %322 = vmatprep.subr.bf16.mxu0 0
        %323 = vmatpush1.bf16.msra.mxu0 %v302
        %324 = vmatprep.subr.bf16.mxu0 0
        %325 = vmatpush1.bf16.msra.mxu0 %v303
        %326 = vmatprep.subr.bf16.mxu0 0
        %327 = vmatpush1.bf16.msra.mxu0 %v304
        %328 = vmatprep.subr.bf16.mxu0 0
        %329 = vmatpush1.bf16.msra.mxu0 %v305
        %330 = vmatprep.subr.bf16.mxu0 0
        %331 = vmatpush1.bf16.msra.mxu0 0
        %332 = vmatprep.subr.bf16.mxu0 0
        %333 = vmatpush1.bf16.msra.mxu0 0
        %334 = vmatprep.subr.bf16.mxu0 0
        %335 = vmatpush1.bf16.msra.mxu0 0
        %336 = vmatprep.subr.bf16.mxu0 0
        %337 = vmatpush1.bf16.msra.mxu0 0
        %338 = vmatprep.subr.bf16.mxu0 0
        %339 = vmatpush1.bf16.msra.mxu0 0
        %340 = vmatprep.subr.bf16.mxu0 0
        %341 = vmatpush1.bf16.msra.mxu0 0
        %342 = vmatprep.subr.bf16.mxu0 0
        %343 = vmatpush1.bf16.msra.mxu0 0
        %344 = vmatprep.subr.bf16.mxu0 0
        %345 = vmatpush1.bf16.msra.mxu0 0
        %346 = vmatprep.mubr.bf16.mxu0 0
        %347 = vmatmul.mubr.bf16.gmra.mrb[0].mxu0 %v249
        %v348 = vpop.f32.mrb[0].mxu0
        %v349 = vadd.f32 0.0, %v348
        %v350 = vpop.f32.mrb[0].mxu0
        %v351 = vpop.f32.mrb[0].mxu0
        %v352 = vpop.f32.mrb[0].mxu0
        %353 = vdwg.mxu0
        %v354 = vmul.f32 %v349, 0.5
        %v355 = vmul.f32 %v349, 0.70710677
        %v356 = verf.f32.pop %v355
        %v357 = vadd.f32 %v356, 1.0
        %v358 = vmul.f32 %v354, %v357
        %v359 = vld [vmem:[%s241] sm:$0xff]
        %v360 = vpack.c.bf16 %v358, %v358
        %v361 = vld [vmem:[#allocation7] sm:$0xf]
        %v362 = vld [vmem:[#allocation7 + $0x4] sm:$0xf]
        %v363 = vld [vmem:[#allocation7 + $0x8] sm:$0xf]
        %v364 = vld [vmem:[#allocation7 + $0xc] sm:$0xf]
        %v365 = vld [vmem:[#allocation7 + $0x10] sm:$0xf]
        %v366 = vld [vmem:[#allocation7 + $0x14] sm:$0xf]
        %v367 = vld [vmem:[#allocation7 + $0x18] sm:$0xf]
        %v368 = vld [vmem:[#allocation7 + $0x1c] sm:$0xf]
        %v369 = vld [vmem:[#allocation7 + $0x20] sm:$0xf]
        %v370 = vld [vmem:[#allocation7 + $0x24] sm:$0xf]
        %v371 = vld [vmem:[#allocation7 + $0x28] sm:$0xf]
        %v372 = vld [vmem:[#allocation7 + $0x2c] sm:$0xf]
        %v373 = vld [vmem:[#allocation7 + $0x30] sm:$0xf]
        %v374 = vld [vmem:[#allocation7 + $0x34] sm:$0xf]
        %v375 = vld [vmem:[#allocation7 + $0x38] sm:$0xf]
        %v376 = vld [vmem:[#allocation7 + $0x3c] sm:$0xf]
        %v393 = vunpack.c.l.b16 %v361
        %v394 = vunpack.c.l.b16 %v362
        %v395 = vunpack.c.l.b16 %v363
        %v396 = vunpack.c.l.b16 %v364
        %v397 = vunpack.c.l.b16 %v365
        %v398 = vunpack.c.l.b16 %v366
        %v399 = vunpack.c.l.b16 %v367
        %v400 = vunpack.c.l.b16 %v368
        %v401 = vunpack.c.l.b16 %v369
        %v402 = vunpack.c.l.b16 %v370
        %v403 = vunpack.c.l.b16 %v371
        %v404 = vunpack.c.l.b16 %v372
        %v405 = vunpack.c.l.b16 %v373
        %v406 = vunpack.c.l.b16 %v374
        %v407 = vunpack.c.l.b16 %v375
        %v408 = vunpack.c.l.b16 %v376
        %v409 = vpack.c.b16 %v394, %v393
        %v410 = vpack.c.b16 %v396, %v395
        %v411 = vpack.c.b16 %v398, %v397
        %v412 = vpack.c.b16 %v400, %v399
        %v413 = vpack.c.b16 %v402, %v401
        %v414 = vpack.c.b16 %v404, %v403
        %v415 = vpack.c.b16 %v406, %v405
        %v416 = vpack.c.b16 %v408, %v407
        %425 = vmatprep.subr.bf16.mxu0 0
        %426 = vmatpush1.bf16.msra.mxu0 %v409
        %427 = vmatprep.subr.bf16.mxu0 0
        %428 = vmatpush1.bf16.msra.mxu0 %v410
        %429 = vmatprep.subr.bf16.mxu0 0
        %430 = vmatpush1.bf16.msra.mxu0 %v411
        %431 = vmatprep.subr.bf16.mxu0 0
        %432 = vmatpush1.bf16.msra.mxu0 %v412
        %433 = vmatprep.subr.bf16.mxu0 0
        %434 = vmatpush1.bf16.msra.mxu0 %v413
        %435 = vmatprep.subr.bf16.mxu0 0
        %436 = vmatpush1.bf16.msra.mxu0 %v414
        %437 = vmatprep.subr.bf16.mxu0 0
        %438 = vmatpush1.bf16.msra.mxu0 %v415
        %439 = vmatprep.subr.bf16.mxu0 0
        %440 = vmatpush1.bf16.msra.mxu0 %v416
        %441 = vmatprep.subr.bf16.mxu0 0
        %442 = vmatpush1.bf16.msra.mxu0 0
        %443 = vmatprep.subr.bf16.mxu0 0
        %444 = vmatpush1.bf16.msra.mxu0 0
        %445 = vmatprep.subr.bf16.mxu0 0
        %446 = vmatpush1.bf16.msra.mxu0 0
        %447 = vmatprep.subr.bf16.mxu0 0
        %448 = vmatpush1.bf16.msra.mxu0 0
        %449 = vmatprep.subr.bf16.mxu0 0
        %450 = vmatpush1.bf16.msra.mxu0 0
        %451 = vmatprep.subr.bf16.mxu0 0
        %452 = vmatpush1.bf16.msra.mxu0 0
        %453 = vmatprep.subr.bf16.mxu0 0
        %454 = vmatpush1.bf16.msra.mxu0 0
        %455 = vmatprep.subr.bf16.mxu0 0
        %456 = vmatpush1.bf16.msra.mxu0 0
        %457 = vmatprep.mubr.bf16.mxu0 0
        %458 = vmatmul.mubr.bf16.gmra.mrb[0].mxu0 %v360
        %v459 = vpop.f32.mrb[0].mxu0
        %v460 = vadd.f32 0.0, %v459
        %v461 = vpop.f32.mrb[0].mxu0
        %v462 = vpop.f32.mrb[0].mxu0
        %v463 = vpop.f32.mrb[0].mxu0
        %464 = vdwg.mxu0
        %v465 = vadd.f32 %v359, %v460
        %466 = vst [vmem:[%s241] sm:$0xff] %v465
        %s467 = sand.u32 %s119, 1
        %s468 = scalar_lea.sflag [#allocation4], %s467
        %s469 = sand.u32 %s119, 1
        %s470 = smul.addr %s469, 8
        %s471 = scalar_lea.vmem [#allocation8], %s470
        // Predicated region
        $region49: #{tpu_custom_call.1} parent=31 // pred_check
          %p472 = pneg %p129
        $region50: #{tpu_custom_call.1} parent=31 // pred_check_branch
          %474 = sbr.rel (%p472) target = $region52
        $region51: #{tpu_custom_call.1} parent=31 // pred_region
          %s476 = ssub.s32 128, 128
          %477 = vsyncadd %s468, %s476
          %s478 = smul.addr %s25, 128
          %s479 = scalar_lea.hbm %s3, %s478
          %s481 = sshll.u32 %s471, 4
          %s482 = int_to_ptr.vmem [resolvable:$true] %s481
          %484 = dma.vmem_to_hbm [thread:$0]  %s482, 128, %s479, %s468
        $region52: #{tpu_custom_call.1} parent=31 // pred_fallthru
          _
      $region32: #{tpu_custom_call.1} parent=5 // pred_fallthru
        _
      %p485 = scmp.le.s32.totalorder 2, %s16
      // Predicated region
      $region53: #{tpu_custom_call.1} parent=5 // pred_check
        %p486 = pneg %p485
      $region54: #{tpu_custom_call.1} parent=5 // pred_check_branch
        %488 = sbr.rel (%p486) target = $region56
      $region55: #{tpu_custom_call.1} parent=5 // pred_region
        %s489 = ssub.s32 %s16, 2
        // Predicated region
        $region57: #{tpu_custom_call.1} parent=55 // pred_check
          %p490 = pneg %p135
        $region58: #{tpu_custom_call.1} parent=55 // pred_check_branch
          %492 = sbr.rel (%p490) target = $region60
        $region59: #{tpu_custom_call.1} parent=55 // pred_region
          %s493 = sand.u32 %s120, 1
          %s494 = scalar_lea.sflag [#allocation4], %s493
          %s495 = sand.u32 %s120, 1
          %s496 = smul.addr %s495, 8
          %s497 = scalar_lea.vmem [#allocation8], %s496
          %498 = dma.done %s494, 128
        $region60: #{tpu_custom_call.1} parent=55 // pred_fallthru
          _
      $region56: #{tpu_custom_call.1} parent=5 // pred_fallthru
        _
    $region6: #{tpu_custom_call.1} parent=1 // loop_footer
      %s20 = sadd.s32 1, %s16
    $region7: #{tpu_custom_call.1} parent=1 // loop_footer_branch
      %15 = sbr.rel target = $region3
    $region8: #{tpu_custom_call.1} parent=1 // loop_exit
      _
    %499 = vsyncpa [#allocation3], 1
    %s500 = scalar_lea.sflag [#allocation3], 1
    %501 = vsyncpa %s500, 1
    %502 = vsyncpa [#allocation6], 1
    %503 = vsyncpa [#allocation4], 1
    %s504 = scalar_lea.sflag [#allocation4], 1
    %505 = vsyncpa %s504, 1

</llo_original>
